<compile_context>
chip_gen: v7x
topology: tpu7x:2x2x1
jax: 0.10.0
libtpu: 0.0.40
codegen_flags: <defaults>
</compile_context>

<pallas_src>
import functools

import jax
import jax.numpy as jnp
from jax.experimental import pallas as pl
from jax.experimental.pallas import tpu as pltpu

NEG_SLOPE = 0.01  # nn.LeakyReLU default


def _leaky_relu(x):
    return jnp.where(x > 0, x, NEG_SLOPE * x)


def _round_up(n, m):
    return ((n + m - 1) // m) * m


def mlp_kernel(x_ref,
               w1_ref, b1_ref,
               w2_ref, b2_ref,
               w3_ref, b3_ref,
               w4_ref, b4_ref,
               o_ref):
    """Full 4-layer MLP on one batch tile.  Weights (bf16) are VMEM-resident;
    matmuls run bf16 x bf16 -> f32 accumulate on the MXU; bias/LeakyReLU in f32."""
    x = x_ref[...].astype(jnp.bfloat16)                                    # (TB, 58)

    h = jnp.dot(x, w1_ref[...], preferred_element_type=jnp.float32) + b1_ref[...]
    h = _leaky_relu(h)                                                     # (TB, 256) f32

    h = jnp.dot(h.astype(jnp.bfloat16), w2_ref[...],
                preferred_element_type=jnp.float32) + b2_ref[...]
    h = _leaky_relu(h)                                                     # (TB, 128)

    h = jnp.dot(h.astype(jnp.bfloat16), w3_ref[...],
                preferred_element_type=jnp.float32) + b3_ref[...]
    h = _leaky_relu(h)                                                     # (TB, 64)

    h = jnp.dot(h.astype(jnp.bfloat16), w4_ref[...],
                preferred_element_type=jnp.float32) + b4_ref[...]
    h = _leaky_relu(h)                                                     # (TB, 8)

    o_ref[...] = h.astype(o_ref.dtype)


@functools.partial(jax.jit, static_argnames=("tile_b",))
def nn_demand_forward(x, params, tile_b=512):
    """x: (B, 58) float32.  params: weights in bf16, biases (1, N) in f32.  -> (B, 8) f32."""
    B, F = x.shape
    assert F == 58

    # Don't oversize the tile for small batches; keep sublane dim a multiple of 8.
    tb = max(8, min(tile_b, _round_up(B, 8)))
    grid = (pl.cdiv(B, tb),)   # partial tail tile handled by Pallas masking

    def batch_map(i):
        return (i, 0)

    def full_map(i):
        return (0, 0)

    in_specs = [
        pl.BlockSpec((tb, 58), batch_map),     # x tile (unpadded K=58)
        pl.BlockSpec((58, 256), full_map),     # w1 (bf16)
        pl.BlockSpec((1, 256), full_map),      # b1
        pl.BlockSpec((256, 128), full_map),    # w2 (bf16)
        pl.BlockSpec((1, 128), full_map),      # b2
        pl.BlockSpec((128, 64), full_map),     # w3 (bf16)
        pl.BlockSpec((1, 64), full_map),       # b3
        pl.BlockSpec((64, 8), full_map),       # w4 (bf16)
        pl.BlockSpec((1, 8), full_map),        # b4
    ]
    out_spec = pl.BlockSpec((tb, 8), batch_map)

    return pl.pallas_call(
        mlp_kernel,
        out_shape=jax.ShapeDtypeStruct((B, 8), jnp.float32),
        grid_spec=pltpu.PrefetchScalarGridSpec(
            num_scalar_prefetch=0,
            grid=grid,
            in_specs=in_specs,
            out_specs=out_spec,
        ),
        compiler_params=pltpu.CompilerParams(
            dimension_semantics=("parallel",)),   # shards batch tiles across v7x's 2 TCs
    )(x, params["w1"], params["b1"],
      params["w2"], params["b2"],
      params["w3"], params["b3"],
      params["w4"], params["b4"])


def frap5_forward(waiting, phase, wtime_mu, wtime_sigma, wtime_max,
                  i_position, j_position, params, tile_b=512):
    """FRAP5.forward: concat (i, j, mu, sigma, max, waiting, phase) -> NN_demand."""
    x = jnp.concatenate(
        [i_position, j_position, wtime_mu, wtime_sigma, wtime_max, waiting, phase],
        axis=1).astype(jnp.float32)
    return nn_demand_forward(x, params, tile_b=tile_b)


def init_params(key):
    """PyTorch-default-like init U(-1/sqrt(fan_in), +1/sqrt(fan_in)), f32."""
    dims = [(58, 256), (256, 128), (128, 64), (64, 8)]
    params = {}
    for idx, (fan_in, fan_out) in enumerate(dims, start=1):
        key, kw, kb = jax.random.split(key, 3)
        bound = float(fan_in) ** -0.5
        params[f"w{idx}"] = jax.random.uniform(
            kw, (fan_in, fan_out), jnp.float32, -bound, bound)
        params[f"b{idx}"] = jax.random.uniform(
            kb, (1, fan_out), jnp.float32, -bound, bound)
    return params


def to_kernel_params(params):
    """Cast weights to bf16 once (halves weight DMA).  Biases stay f32."""
    out = dict(params)
    for i in range(1, 5):
        out[f"w{i}"] = params[f"w{i}"].astype(jnp.bfloat16)
    return out


def reference_forward(x, params):
    """Pure-JAX f32 reference of NN_demand (eval mode) on the same (bf16) weights."""
    h = x
    for i in range(1, 5):
        h = h @ params[f"w{i}"].astype(jnp.float32) + params[f"b{i}"]
        h = jnp.where(h > 0, h, NEG_SLOPE * h)
    return h


if __name__ == "__main__":
    key = jax.random.PRNGKey(0)
    params = init_params(key)
    kparams = to_kernel_params(params)

    # Small deterministic example; feature split 8+8+8+8+8+8+10 = 58.
    B = 16
    key, *ks = jax.random.split(key, 8)
    i_position = jax.random.normal(ks[0], (B, 8), jnp.float32)
    j_position = jax.random.normal(ks[1], (B, 8), jnp.float32)
    wtime_mu = jax.random.normal(ks[2], (B, 8), jnp.float32)
    wtime_sigma = jax.random.normal(ks[3], (B, 8), jnp.float32)
    wtime_max = jax.random.normal(ks[4], (B, 8), jnp.float32)
    waiting = jax.random.normal(ks[5], (B, 8), jnp.float32)
    phase = jax.random.normal(ks[6], (B, 10), jnp.float32)

    out = frap5_forward(waiting, phase, wtime_mu, wtime_sigma, wtime_max,
                        i_position, j_position, kparams)
    out = jax.block_until_ready(out)

    x = jnp.concatenate([i_position, j_position, wtime_mu, wtime_sigma,
                         wtime_max, waiting, phase], axis=1)
    ref = reference_forward(x, kparams)

    assert out.shape == (B, 8), out.shape
    max_err = float(jnp.max(jnp.abs(out - ref)))
    # bf16 matmul with f32 accumulation: tolerance loosened vs. pure f32.
    assert jnp.allclose(out, ref, atol=3e-2, rtol=3e-2), max_err

    print("KERNEL_OK")
</pallas_src>

<mosaic_0001>
module attributes {stable_mosaic.version = 11 : i64} {
  func.func @mlp_kernel(%arg0: i32, %arg1: memref<16x58xf32, #tpu.memory_space<vmem>>, %arg2: memref<58x256xbf16, #tpu.memory_space<vmem>>, %arg3: memref<1x256xf32, #tpu.memory_space<vmem>>, %arg4: memref<256x128xbf16, #tpu.memory_space<vmem>>, %arg5: memref<1x128xf32, #tpu.memory_space<vmem>>, %arg6: memref<128x64xbf16, #tpu.memory_space<vmem>>, %arg7: memref<1x64xf32, #tpu.memory_space<vmem>>, %arg8: memref<64x8xbf16, #tpu.memory_space<vmem>>, %arg9: memref<1x8xf32, #tpu.memory_space<vmem>>, %arg10: memref<16x8xf32, #tpu.memory_space<vmem>>) attributes {dimension_semantics = [#tpu.dimension_semantics<parallel>], iteration_bounds = array<i64: 1>, scalar_prefetch = 0 : i64, scratch_operands = 0 : i64, tpu.core_type = #tpu.core_type<tc>, window_params = [{transform_indices = @transform_0, window_bounds = array<i64: 16, 58>}, {pipeline_mode = #tpu.pipeline_mode<synchronous>, transform_indices = @transform_1, window_bounds = array<i64: 58, 256>}, {pipeline_mode = #tpu.pipeline_mode<synchronous>, transform_indices = @transform_2, window_bounds = array<i64: 1, 256>}, {pipeline_mode = #tpu.pipeline_mode<synchronous>, transform_indices = @transform_3, window_bounds = array<i64: 256, 128>}, {pipeline_mode = #tpu.pipeline_mode<synchronous>, transform_indices = @transform_4, window_bounds = array<i64: 1, 128>}, {pipeline_mode = #tpu.pipeline_mode<synchronous>, transform_indices = @transform_5, window_bounds = array<i64: 128, 64>}, {pipeline_mode = #tpu.pipeline_mode<synchronous>, transform_indices = @transform_6, window_bounds = array<i64: 1, 64>}, {pipeline_mode = #tpu.pipeline_mode<synchronous>, transform_indices = @transform_7, window_bounds = array<i64: 64, 8>}, {pipeline_mode = #tpu.pipeline_mode<synchronous>, transform_indices = @transform_8, window_bounds = array<i64: 1, 8>}, {transform_indices = @transform_9, window_bounds = array<i64: 16, 8>}]} {
    %c0 = arith.constant 0 : index
    %c0_0 = arith.constant 0 : index
    %0 = vector.load %arg1[%c0, %c0_0] : memref<16x58xf32, #tpu.memory_space<vmem>>, vector<16x58xf32>
    %1 = arith.truncf %0 : vector<16x58xf32> to vector<16x58xbf16>
    %c0_1 = arith.constant 0 : index
    %c0_2 = arith.constant 0 : index
    %2 = vector.load %arg2[%c0_1, %c0_2] : memref<58x256xbf16, #tpu.memory_space<vmem>>, vector<58x256xbf16>
    %cst = arith.constant dense<0.000000e+00> : vector<16x256xf32>
    %3 = tpu.matmul %1, %2, %cst {dimension_numbers = #tpu.dot_dimension_numbers<[1], [0], [0], [1], [0, 0, 1, 1], [], []>} : vector<16x58xbf16>, vector<58x256xbf16>, vector<16x256xf32> -> vector<16x256xf32>
    %c0_3 = arith.constant 0 : index
    %c0_4 = arith.constant 0 : index
    %4 = vector.load %arg3[%c0_3, %c0_4] : memref<1x256xf32, #tpu.memory_space<vmem>>, vector<1x256xf32>
    %5 = vector.broadcast %4 : vector<1x256xf32> to vector<16x256xf32>
    %6 = arith.addf %3, %5 : vector<16x256xf32>
    %cst_5 = arith.constant 0.000000e+00 : f32
    %7 = vector.broadcast %cst_5 : f32 to vector<16x256xf32>
    %8 = arith.cmpf ogt, %6, %7 : vector<16x256xf32>
    %cst_6 = arith.constant 0.00999999977 : f32
    %9 = vector.broadcast %cst_6 : f32 to vector<16x256xf32>
    %10 = arith.mulf %9, %6 : vector<16x256xf32>
    %11 = arith.select %8, %6, %10 : vector<16x256xi1>, vector<16x256xf32>
    %12 = arith.truncf %11 : vector<16x256xf32> to vector<16x256xbf16>
    %c0_7 = arith.constant 0 : index
    %c0_8 = arith.constant 0 : index
    %13 = vector.load %arg4[%c0_7, %c0_8] : memref<256x128xbf16, #tpu.memory_space<vmem>>, vector<256x128xbf16>
    %cst_9 = arith.constant dense<0.000000e+00> : vector<16x128xf32>
    %14 = tpu.matmul %12, %13, %cst_9 {dimension_numbers = #tpu.dot_dimension_numbers<[1], [0], [0], [1], [0, 0, 1, 1], [], []>} : vector<16x256xbf16>, vector<256x128xbf16>, vector<16x128xf32> -> vector<16x128xf32>
    %c0_10 = arith.constant 0 : index
    %c0_11 = arith.constant 0 : index
    %15 = vector.load %arg5[%c0_10, %c0_11] : memref<1x128xf32, #tpu.memory_space<vmem>>, vector<1x128xf32>
    %16 = vector.broadcast %15 : vector<1x128xf32> to vector<16x128xf32>
    %17 = arith.addf %14, %16 : vector<16x128xf32>
    %cst_12 = arith.constant 0.000000e+00 : f32
    %18 = vector.broadcast %cst_12 : f32 to vector<16x128xf32>
    %19 = arith.cmpf ogt, %17, %18 : vector<16x128xf32>
    %cst_13 = arith.constant 0.00999999977 : f32
    %20 = vector.broadcast %cst_13 : f32 to vector<16x128xf32>
    %21 = arith.mulf %20, %17 : vector<16x128xf32>
    %22 = arith.select %19, %17, %21 : vector<16x128xi1>, vector<16x128xf32>
    %23 = arith.truncf %22 : vector<16x128xf32> to vector<16x128xbf16>
    %c0_14 = arith.constant 0 : index
    %c0_15 = arith.constant 0 : index
    %24 = vector.load %arg6[%c0_14, %c0_15] : memref<128x64xbf16, #tpu.memory_space<vmem>>, vector<128x64xbf16>
    %cst_16 = arith.constant dense<0.000000e+00> : vector<16x64xf32>
    %25 = tpu.matmul %23, %24, %cst_16 {dimension_numbers = #tpu.dot_dimension_numbers<[1], [0], [0], [1], [0, 0, 1, 1], [], []>} : vector<16x128xbf16>, vector<128x64xbf16>, vector<16x64xf32> -> vector<16x64xf32>
    %c0_17 = arith.constant 0 : index
    %c0_18 = arith.constant 0 : index
    %26 = vector.load %arg7[%c0_17, %c0_18] : memref<1x64xf32, #tpu.memory_space<vmem>>, vector<1x64xf32>
    %27 = vector.broadcast %26 : vector<1x64xf32> to vector<16x64xf32>
    %28 = arith.addf %25, %27 : vector<16x64xf32>
    %cst_19 = arith.constant 0.000000e+00 : f32
    %29 = vector.broadcast %cst_19 : f32 to vector<16x64xf32>
    %30 = arith.cmpf ogt, %28, %29 : vector<16x64xf32>
    %cst_20 = arith.constant 0.00999999977 : f32
    %31 = vector.broadcast %cst_20 : f32 to vector<16x64xf32>
    %32 = arith.mulf %31, %28 : vector<16x64xf32>
    %33 = arith.select %30, %28, %32 : vector<16x64xi1>, vector<16x64xf32>
    %34 = arith.truncf %33 : vector<16x64xf32> to vector<16x64xbf16>
    %c0_21 = arith.constant 0 : index
    %c0_22 = arith.constant 0 : index
    %35 = vector.load %arg8[%c0_21, %c0_22] : memref<64x8xbf16, #tpu.memory_space<vmem>>, vector<64x8xbf16>
    %cst_23 = arith.constant dense<0.000000e+00> : vector<16x8xf32>
    %36 = tpu.matmul %34, %35, %cst_23 {dimension_numbers = #tpu.dot_dimension_numbers<[1], [0], [0], [1], [0, 0, 1, 1], [], []>} : vector<16x64xbf16>, vector<64x8xbf16>, vector<16x8xf32> -> vector<16x8xf32>
    %c0_24 = arith.constant 0 : index
    %c0_25 = arith.constant 0 : index
    %37 = vector.load %arg9[%c0_24, %c0_25] : memref<1x8xf32, #tpu.memory_space<vmem>>, vector<1x8xf32>
    %38 = vector.broadcast %37 : vector<1x8xf32> to vector<16x8xf32>
    %39 = arith.addf %36, %38 : vector<16x8xf32>
    %cst_26 = arith.constant 0.000000e+00 : f32
    %40 = vector.broadcast %cst_26 : f32 to vector<16x8xf32>
    %41 = arith.cmpf ogt, %39, %40 : vector<16x8xf32>
    %cst_27 = arith.constant 0.00999999977 : f32
    %42 = vector.broadcast %cst_27 : f32 to vector<16x8xf32>
    %43 = arith.mulf %42, %39 : vector<16x8xf32>
    %44 = arith.select %41, %39, %43 : vector<16x8xi1>, vector<16x8xf32>
    %c0_28 = arith.constant 0 : index
    %c0_29 = arith.constant 0 : index
    %45 = vector.load %arg10[%c0_28, %c0_29] : memref<16x8xf32, #tpu.memory_space<vmem>>, vector<16x8xf32>
    tpu.vector_store %arg10[%c0_28, %c0_29], %44 {strides = array<i32>} : memref<16x8xf32, #tpu.memory_space<vmem>>, vector<16x8xf32>,
    return
  }
  func.func @transform_0(%arg0: i32) -> (i32, i32) {
    %c0_i32 = arith.constant 0 : i32
    %c0_i32_0 = arith.constant 0 : i32
    return %arg0, %c0_i32 : i32, i32
  }
  func.func @transform_1(%arg0: i32) -> (i32, i32) {
    %c0_i32 = arith.constant 0 : i32
    %c0_i32_0 = arith.constant 0 : i32
    %c0_i32_1 = arith.constant 0 : i32
    return %c0_i32, %c0_i32_0 : i32, i32
  }
  func.func @transform_2(%arg0: i32) -> (i32, i32) {
    %c0_i32 = arith.constant 0 : i32
    %c0_i32_0 = arith.constant 0 : i32
    %c0_i32_1 = arith.constant 0 : i32
    return %c0_i32, %c0_i32_0 : i32, i32
  }
  func.func @transform_3(%arg0: i32) -> (i32, i32) {
    %c0_i32 = arith.constant 0 : i32
    %c0_i32_0 = arith.constant 0 : i32
    %c0_i32_1 = arith.constant 0 : i32
    return %c0_i32, %c0_i32_0 : i32, i32
  }
  func.func @transform_4(%arg0: i32) -> (i32, i32) {
    %c0_i32 = arith.constant 0 : i32
    %c0_i32_0 = arith.constant 0 : i32
    %c0_i32_1 = arith.constant 0 : i32
    return %c0_i32, %c0_i32_0 : i32, i32
  }
  func.func @transform_5(%arg0: i32) -> (i32, i32) {
    %c0_i32 = arith.constant 0 : i32
    %c0_i32_0 = arith.constant 0 : i32
    %c0_i32_1 = arith.constant 0 : i32
    return %c0_i32, %c0_i32_0 : i32, i32
  }
  func.func @transform_6(%arg0: i32) -> (i32, i32) {
    %c0_i32 = arith.constant 0 : i32
    %c0_i32_0 = arith.constant 0 : i32
    %c0_i32_1 = arith.constant 0 : i32
    return %c0_i32, %c0_i32_0 : i32, i32
  }
  func.func @transform_7(%arg0: i32) -> (i32, i32) {
    %c0_i32 = arith.constant 0 : i32
    %c0_i32_0 = arith.constant 0 : i32
    %c0_i32_1 = arith.constant 0 : i32
    return %c0_i32, %c0_i32_0 : i32, i32
  }
  func.func @transform_8(%arg0: i32) -> (i32, i32) {
    %c0_i32 = arith.constant 0 : i32
    %c0_i32_0 = arith.constant 0 : i32
    %c0_i32_1 = arith.constant 0 : i32
    return %c0_i32, %c0_i32_0 : i32, i32
  }
  func.func @transform_9(%arg0: i32) -> (i32, i32) {
    %c0_i32 = arith.constant 0 : i32
    %c0_i32_0 = arith.constant 0 : i32
    return %arg0, %c0_i32 : i32, i32
  }
}

</mosaic_0001>

<llo_original>
// kernel: nn_demand_forward.1
$region0: #{nn_demand_forward.1}
  #allocation0 [shape = 'u32[]', space=smem, size = 0x4, offset = 0x4, fixed_abs, tag = 'smem constant byte address 0x4 - core index']
  #allocation1 [shape = 'u32[144,128]{1,0:T(1,128)}', space=vmem, size = 0x12000, scoped, tag = 'internal scratch']
  %s0 = inlined_call_operand.vmem [shape: f32[16,58], index: 0, kind: input, shape index: {}]
  %s1 = inlined_call_operand.hbm [shape: bf16[58,256], index: 1, kind: input, shape index: {}]
  %s2 = inlined_call_operand.vmem [shape: f32[1,256], index: 2, kind: input, shape index: {}]
  %s3 = inlined_call_operand.vmem [shape: bf16[256,128], index: 3, kind: input, shape index: {}]
  %s4 = inlined_call_operand.vmem [shape: f32[1,128], index: 4, kind: input, shape index: {}]
  %s5 = inlined_call_operand.vmem [shape: bf16[128,64], index: 5, kind: input, shape index: {}]
  %s6 = inlined_call_operand.vmem [shape: f32[1,64], index: 6, kind: input, shape index: {}]
  %s7 = inlined_call_operand.vmem [shape: bf16[64,8], index: 7, kind: input, shape index: {}]
  %s8 = inlined_call_operand.vmem [shape: f32[1,8], index: 8, kind: input, shape index: {}]
  %s9 = inlined_call_operand.vmem [shape: f32[16,8], index: 9, kind: output, shape index: {}]
  %s10 = sld [smem:[#allocation0]]
  $region50: #{nn_demand_forward.1} parent=0
    _
  %s12 = ssub.s32 1, %s10
  %s13 = scalar_select 0, %s12, %s10
  $region1: #{nn_demand_forward.1} parent=0
    #allocation2 [shape = 'u8[32768]{0}', space=vmem, size = 0x8000, scoped, tag = 'input window, operand 1, single buffered']
    #allocation3 [shape = 's32[1]{0}', space=sflag, size = 0x4, scoped, tag = 'scoped memory for nn_demand_forward.1']
    %14 = vsyncpa [#allocation3], 0
    // Predicated region
    $region2: #{nn_demand_forward.1} parent=1 // pred_check
      _
    $region3: #{nn_demand_forward.1} parent=1 // pred_check_branch
      %16 = sbr.rel (0) target = $region5
    $region4: #{nn_demand_forward.1} parent=1 // pred_region
      _
    $region5: #{nn_demand_forward.1} parent=1 // pred_fallthru
      _
    // Predicated region
    $region6: #{nn_demand_forward.1} parent=1 // pred_check
      _
    $region7: #{nn_demand_forward.1} parent=1 // pred_check_branch
      %18 = sbr.rel (0) target = $region9
    $region8: #{nn_demand_forward.1} parent=1 // pred_region
      %s20 = ssub.s32 1024, 1024
      %21 = vsyncadd [#allocation3], %s20
      %s22 = sshll.u32 [#allocation2], 4
      %s23 = int_to_ptr.vmem [resolvable:$true] %s22
      %28 = dma.hbm_to_vmem [thread:$0]  %s1, 1024, %s23, [#allocation3], 128, 128, 8
    $region9: #{nn_demand_forward.1} parent=1 // pred_fallthru
      _
    // Predicated region
    $region10: #{nn_demand_forward.1} parent=1 // pred_check
      _
    $region11: #{nn_demand_forward.1} parent=1 // pred_check_branch
      %30 = sbr.rel (0) target = $region13
    $region12: #{nn_demand_forward.1} parent=1 // pred_region
      _
    $region13: #{nn_demand_forward.1} parent=1 // pred_fallthru
      _
    // Predicated region
    $region14: #{nn_demand_forward.1} parent=1 // pred_check
      _
    $region15: #{nn_demand_forward.1} parent=1 // pred_check_branch
      %32 = sbr.rel (0) target = $region17
    $region16: #{nn_demand_forward.1} parent=1 // pred_region
      _
    $region17: #{nn_demand_forward.1} parent=1 // pred_fallthru
      _
    // Predicated region
    $region18: #{nn_demand_forward.1} parent=1 // pred_check
      _
    $region19: #{nn_demand_forward.1} parent=1 // pred_check_branch
      %34 = sbr.rel (0) target = $region21
    $region20: #{nn_demand_forward.1} parent=1 // pred_region
      _
    $region21: #{nn_demand_forward.1} parent=1 // pred_fallthru
      _
    // Predicated region
    $region22: #{nn_demand_forward.1} parent=1 // pred_check
      _
    $region23: #{nn_demand_forward.1} parent=1 // pred_check_branch
      %36 = sbr.rel (0) target = $region25
    $region24: #{nn_demand_forward.1} parent=1 // pred_region
      _
    $region25: #{nn_demand_forward.1} parent=1 // pred_fallthru
      _
    // Predicated region
    $region26: #{nn_demand_forward.1} parent=1 // pred_check
      _
    $region27: #{nn_demand_forward.1} parent=1 // pred_check_branch
      %38 = sbr.rel (0) target = $region29
    $region28: #{nn_demand_forward.1} parent=1 // pred_region
      _
    $region29: #{nn_demand_forward.1} parent=1 // pred_fallthru
      _
    // Predicated region
    $region30: #{nn_demand_forward.1} parent=1 // pred_check
      _
    $region31: #{nn_demand_forward.1} parent=1 // pred_check_branch
      %40 = sbr.rel (0) target = $region33
    $region32: #{nn_demand_forward.1} parent=1 // pred_region
      _
    $region33: #{nn_demand_forward.1} parent=1 // pred_fallthru
      _
    // Predicated region
    $region34: #{nn_demand_forward.1} parent=1 // pred_check
      _
    $region35: #{nn_demand_forward.1} parent=1 // pred_check_branch
      %42 = sbr.rel (0) target = $region37
    $region36: #{nn_demand_forward.1} parent=1 // pred_region
      _
    $region37: #{nn_demand_forward.1} parent=1 // pred_fallthru
      _
    // Predicated region
    $region38: #{nn_demand_forward.1} parent=1 // pred_check
      _
    $region39: #{nn_demand_forward.1} parent=1 // pred_check_branch
      %44 = sbr.rel (0) target = $region41
    $region40: #{nn_demand_forward.1} parent=1 // pred_region
      %45 = dma.done [#allocation3], 1024
    $region41: #{nn_demand_forward.1} parent=1 // pred_fallthru
      _
    %v47 = vld [vmem:[%s0] sm:$0xff]
    %v48 = vld [vmem:[%s0 + $0x8] sm:$0xff]
    %v49 = vpack.c.bf16 %v48, %v47
    %v50 = vld [vmem:[#allocation2] sm:$0xff]
    %v51 = vld [vmem:[#allocation2 + $0x8] sm:$0xff]
    %v52 = vld [vmem:[#allocation2 + $0x10] sm:$0xff]
    %v53 = vld [vmem:[#allocation2 + $0x18] sm:$0xff]
    %v54 = vld [vmem:[#allocation2 + $0x20] sm:$0xff]
    %v55 = vld [vmem:[#allocation2 + $0x28] sm:$0xff]
    %v56 = vld [vmem:[#allocation2 + $0x30] sm:$0xff]
    %v57 = vld [vmem:[#allocation2 + $0x38] sm:$0x11]
    %v58 = vld [vmem:[%s2] sm:$0x3]
    %v60 = vlaneseq
    %v61 = vshrl.u32 %v60, 7
    %v62 = vsub.s32 0, %v61
    %v63 = vrot.slane %v58, %v62
    %v64 = vlaneseq
    %v65 = vshrl.u32 %v64, 7
    %v66 = vsub.s32 1, %v65
    %v67 = vrot.slane %v58, %v66
    %v78 = vunpack.c.l.b16 %v50
    %v79 = vunpack.c.h.b16 %v50
    %v80 = vunpack.c.l.b16 %v51
    %v81 = vunpack.c.h.b16 %v51
    %v82 = vunpack.c.l.b16 %v52
    %v83 = vunpack.c.h.b16 %v52
    %v84 = vunpack.c.l.b16 %v53
    %v85 = vunpack.c.h.b16 %v53
    %v86 = vunpack.c.l.b16 %v54
    %v87 = vunpack.c.h.b16 %v54
    %v88 = vunpack.c.l.b16 %v55
    %v89 = vunpack.c.h.b16 %v55
    %v90 = vunpack.c.l.b16 %v56
    %v91 = vunpack.c.h.b16 %v56
    %v92 = vunpack.c.l.b16 %v57
    %v93 = vunpack.c.h.b16 %v57
    %v94 = vpack.c.b16 %v80, %v78
    %v95 = vpack.c.b16 %v81, %v79
    %v96 = vpack.c.b16 %v84, %v82
    %v97 = vpack.c.b16 %v85, %v83
    %v98 = vpack.c.b16 %v88, %v86
    %v99 = vpack.c.b16 %v89, %v87
    %v100 = vpack.c.b16 %v92, %v90
    %v101 = vpack.c.b16 %v93, %v91
    %vm108 = vcmask 474112
    %v110 = vsel %vm108, %v49, 0
    %vm112 = vcmask 1044480
    %v114 = vsel %vm112, %v100, 0
    %v117 = vsel %vm112, %v101, 0
    %119 = vmatprep.subr.bf16.mxu0 %v95
    %120 = vmatpush1.bf16.msra.mxu0 %v94
    %121 = vmatprep.subr.bf16.mxu0 %v97
    %122 = vmatpush1.bf16.msra.mxu0 %v96
    %123 = vmatprep.subr.bf16.mxu0 %v99
    %124 = vmatpush1.bf16.msra.mxu0 %v98
    %125 = vmatprep.subr.bf16.mxu0 %v117
    %126 = vmatpush1.bf16.msra.mxu0 %v114
    %127 = vmatprep.subr.bf16.mxu0 0
    %128 = vmatpush1.bf16.msra.mxu0 0
    %129 = vmatprep.subr.bf16.mxu0 0
    %130 = vmatpush1.bf16.msra.mxu0 0
    %131 = vmatprep.subr.bf16.mxu0 0
    %132 = vmatpush1.bf16.msra.mxu0 0
    %133 = vmatprep.subr.bf16.mxu0 0
    %134 = vmatpush1.bf16.msra.mxu0 0
    %135 = vmatprep.subr.bf16.mxu0 0
    %136 = vmatpush1.bf16.msra.mxu0 0
    %137 = vmatprep.subr.bf16.mxu0 0
    %138 = vmatpush1.bf16.msra.mxu0 0
    %139 = vmatprep.subr.bf16.mxu0 0
    %140 = vmatpush1.bf16.msra.mxu0 0
    %141 = vmatprep.subr.bf16.mxu0 0
    %142 = vmatpush1.bf16.msra.mxu0 0
    %143 = vmatprep.subr.bf16.mxu0 0
    %144 = vmatpush1.bf16.msra.mxu0 0
    %145 = vmatprep.subr.bf16.mxu0 0
    %146 = vmatpush1.bf16.msra.mxu0 0
    %147 = vmatprep.subr.bf16.mxu0 0
    %148 = vmatpush1.bf16.msra.mxu0 0
    %149 = vmatprep.subr.bf16.mxu0 0
    %150 = vmatpush1.bf16.msra.mxu0 0
    %151 = vmatprep.mubr.bf16.mxu0 0
    %152 = vmatmul.mubr.bf16.gmra.mrb[0].mxu0 %v110
    %v153 = vpop.f32.mrb[0].mxu0
    %v154 = vadd.f32 %v63, %v153
    %v155 = vpop.f32.mrb[0].mxu0
    %v156 = vadd.f32 %v67, %v155
    %v157 = vpop.f32.mrb[0].mxu0
    %v158 = vadd.f32 %v63, %v157
    %v159 = vpop.f32.mrb[0].mxu0
    %v160 = vadd.f32 %v67, %v159
    %161 = vdwg.mxu0
    %vm162 = vcmp.gt.f32.partialorder %v154, 0.0
    %vm163 = vcmp.gt.f32.partialorder %v156, 0.0
    %vm164 = vcmp.gt.f32.partialorder %v158, 0.0
    %vm165 = vcmp.gt.f32.partialorder %v160, 0.0
    %v166 = vmul.f32 %v154, 0.01
    %v167 = vmul.f32 %v156, 0.01
    %v168 = vmul.f32 %v158, 0.01
    %v169 = vmul.f32 %v160, 0.01
    %v170 = vsel %vm162, %v154, %v166
    %v171 = vsel %vm163, %v156, %v167
    %v172 = vsel %vm164, %v158, %v168
    %v173 = vsel %vm165, %v160, %v169
    %v174 = vpack.c.bf16 %v172, %v170
    %v175 = vpack.c.bf16 %v173, %v171
    %v176 = vld [vmem:[%s3] sm:$0xf]
    %v177 = vld [vmem:[%s3 + $0x4] sm:$0xf]
    %v178 = vld [vmem:[%s3 + $0x8] sm:$0xf]
    %v179 = vld [vmem:[%s3 + $0xc] sm:$0xf]
    %v180 = vld [vmem:[%s3 + $0x10] sm:$0xf]
    %v181 = vld [vmem:[%s3 + $0x14] sm:$0xf]
    %v182 = vld [vmem:[%s3 + $0x18] sm:$0xf]
    %v183 = vld [vmem:[%s3 + $0x1c] sm:$0xf]
    %v184 = vld [vmem:[%s3 + $0x20] sm:$0xf]
    %v185 = vld [vmem:[%s3 + $0x24] sm:$0xf]
    %v186 = vld [vmem:[%s3 + $0x28] sm:$0xf]
    %v187 = vld [vmem:[%s3 + $0x2c] sm:$0xf]
    %v188 = vld [vmem:[%s3 + $0x30] sm:$0xf]
    %v189 = vld [vmem:[%s3 + $0x34] sm:$0xf]
    %v190 = vld [vmem:[%s3 + $0x38] sm:$0xf]
    %v191 = vld [vmem:[%s3 + $0x3c] sm:$0xf]
    %v192 = vld [vmem:[%s3 + $0x40] sm:$0xf]
    %v193 = vld [vmem:[%s3 + $0x44] sm:$0xf]
    %v194 = vld [vmem:[%s3 + $0x48] sm:$0xf]
    %v195 = vld [vmem:[%s3 + $0x4c] sm:$0xf]
    %v196 = vld [vmem:[%s3 + $0x50] sm:$0xf]
    %v197 = vld [vmem:[%s3 + $0x54] sm:$0xf]
    %v198 = vld [vmem:[%s3 + $0x58] sm:$0xf]
    %v199 = vld [vmem:[%s3 + $0x5c] sm:$0xf]
    %v200 = vld [vmem:[%s3 + $0x60] sm:$0xf]
    %v201 = vld [vmem:[%s3 + $0x64] sm:$0xf]
    %v202 = vld [vmem:[%s3 + $0x68] sm:$0xf]
    %v203 = vld [vmem:[%s3 + $0x6c] sm:$0xf]
    %v204 = vld [vmem:[%s3 + $0x70] sm:$0xf]
    %v205 = vld [vmem:[%s3 + $0x74] sm:$0xf]
    %v206 = vld [vmem:[%s3 + $0x78] sm:$0xf]
    %v207 = vld [vmem:[%s3 + $0x7c] sm:$0xf]
    %v208 = vld [vmem:[%s4] sm:$0x1]
    %v210 = vlaneseq
    %v211 = vshrl.u32 %v210, 7
    %v212 = vsub.s32 0, %v211
    %v213 = vrot.slane %v208, %v212
    %v247 = vunpack.c.l.b16 %v176
    %v248 = vunpack.c.l.b16 %v177
    %v249 = vunpack.c.l.b16 %v178
    %v250 = vunpack.c.l.b16 %v179
    %v251 = vunpack.c.l.b16 %v180
    %v252 = vunpack.c.l.b16 %v181
    %v253 = vunpack.c.l.b16 %v182
    %v254 = vunpack.c.l.b16 %v183
    %v255 = vunpack.c.l.b16 %v184
    %v256 = vunpack.c.l.b16 %v185
    %v257 = vunpack.c.l.b16 %v186
    %v258 = vunpack.c.l.b16 %v187
    %v259 = vunpack.c.l.b16 %v188
    %v260 = vunpack.c.l.b16 %v189
    %v261 = vunpack.c.l.b16 %v190
    %v262 = vunpack.c.l.b16 %v191
    %v263 = vunpack.c.l.b16 %v192
    %v264 = vunpack.c.l.b16 %v193
    %v265 = vunpack.c.l.b16 %v194
    %v266 = vunpack.c.l.b16 %v195
    %v267 = vunpack.c.l.b16 %v196
    %v268 = vunpack.c.l.b16 %v197
    %v269 = vunpack.c.l.b16 %v198
    %v270 = vunpack.c.l.b16 %v199
    %v271 = vunpack.c.l.b16 %v200
    %v272 = vunpack.c.l.b16 %v201
    %v273 = vunpack.c.l.b16 %v202
    %v274 = vunpack.c.l.b16 %v203
    %v275 = vunpack.c.l.b16 %v204
    %v276 = vunpack.c.l.b16 %v205
    %v277 = vunpack.c.l.b16 %v206
    %v278 = vunpack.c.l.b16 %v207
    %v279 = vpack.c.b16 %v248, %v247
    %v280 = vpack.c.b16 %v250, %v249
    %v281 = vpack.c.b16 %v252, %v251
    %v282 = vpack.c.b16 %v254, %v253
    %v283 = vpack.c.b16 %v256, %v255
    %v284 = vpack.c.b16 %v258, %v257
    %v285 = vpack.c.b16 %v260, %v259
    %v286 = vpack.c.b16 %v262, %v261
    %v287 = vpack.c.b16 %v264, %v263
    %v288 = vpack.c.b16 %v266, %v265
    %v289 = vpack.c.b16 %v268, %v267
    %v290 = vpack.c.b16 %v270, %v269
    %v291 = vpack.c.b16 %v272, %v271
    %v292 = vpack.c.b16 %v274, %v273
    %v293 = vpack.c.b16 %v276, %v275
    %v294 = vpack.c.b16 %v278, %v277
    %311 = vmatprep.subr.bf16.mxu0 0
    %312 = vmatpush1.bf16.msra.mxu0 %v279
    %313 = vmatprep.subr.bf16.mxu0 0
    %314 = vmatpush1.bf16.msra.mxu0 %v280
    %315 = vmatprep.subr.bf16.mxu0 0
    %316 = vmatpush1.bf16.msra.mxu0 %v281
    %317 = vmatprep.subr.bf16.mxu0 0
    %318 = vmatpush1.bf16.msra.mxu0 %v282
    %319 = vmatprep.subr.bf16.mxu0 0
    %320 = vmatpush1.bf16.msra.mxu0 %v283
    %321 = vmatprep.subr.bf16.mxu0 0
    %322 = vmatpush1.bf16.msra.mxu0 %v284
    %323 = vmatprep.subr.bf16.mxu0 0
    %324 = vmatpush1.bf16.msra.mxu0 %v285
    %325 = vmatprep.subr.bf16.mxu0 0
    %326 = vmatpush1.bf16.msra.mxu0 %v286
    %327 = vmatprep.subr.bf16.mxu0 0
    %328 = vmatpush1.bf16.msra.mxu0 %v287
    %329 = vmatprep.subr.bf16.mxu0 0
    %330 = vmatpush1.bf16.msra.mxu0 %v288
    %331 = vmatprep.subr.bf16.mxu0 0
    %332 = vmatpush1.bf16.msra.mxu0 %v289
    %333 = vmatprep.subr.bf16.mxu0 0
    %334 = vmatpush1.bf16.msra.mxu0 %v290
    %335 = vmatprep.subr.bf16.mxu0 0
    %336 = vmatpush1.bf16.msra.mxu0 %v291
    %337 = vmatprep.subr.bf16.mxu0 0
    %338 = vmatpush1.bf16.msra.mxu0 %v292
    %339 = vmatprep.subr.bf16.mxu0 0
    %340 = vmatpush1.bf16.msra.mxu0 %v293
    %341 = vmatprep.subr.bf16.mxu0 0
    %342 = vmatpush1.bf16.msra.mxu0 %v294
    %343 = vmatprep.mubr.bf16.mxu0 %v175
    %344 = vmatmul.mubr.bf16.gmra.mrb[0].mxu0 %v174
    %v345 = vpop.f32.mrb[0].mxu0
    %v346 = vadd.f32 %v213, %v345
    %v347 = vpop.f32.mrb[0].mxu0
    %v348 = vpop.f32.mrb[0].mxu0
    %v349 = vadd.f32 %v213, %v348
    %v350 = vpop.f32.mrb[0].mxu0
    %351 = vdwg.mxu0
    %vm352 = vcmp.gt.f32.partialorder %v346, 0.0
    %vm353 = vcmp.gt.f32.partialorder %v349, 0.0
    %v354 = vmul.f32 %v346, 0.01
    %v355 = vmul.f32 %v349, 0.01
    %v356 = vsel %vm352, %v346, %v354
    %v357 = vsel %vm353, %v349, %v355
    %v358 = vpack.c.bf16 %v357, %v356
    %v359 = vld [vmem:[%s5] sm:$0xf]
    %v360 = vld [vmem:[%s5 + $0x4] sm:$0xf]
    %v361 = vld [vmem:[%s5 + $0x8] sm:$0xf]
    %v362 = vld [vmem:[%s5 + $0xc] sm:$0xf]
    %v363 = vld [vmem:[%s5 + $0x10] sm:$0xf]
    %v364 = vld [vmem:[%s5 + $0x14] sm:$0xf]
    %v365 = vld [vmem:[%s5 + $0x18] sm:$0xf]
    %v366 = vld [vmem:[%s5 + $0x1c] sm:$0xf]
    %v367 = vld [vmem:[%s5 + $0x20] sm:$0xf]
    %v368 = vld [vmem:[%s5 + $0x24] sm:$0xf]
    %v369 = vld [vmem:[%s5 + $0x28] sm:$0xf]
    %v370 = vld [vmem:[%s5 + $0x2c] sm:$0xf]
    %v371 = vld [vmem:[%s5 + $0x30] sm:$0xf]
    %v372 = vld [vmem:[%s5 + $0x34] sm:$0xf]
    %v373 = vld [vmem:[%s5 + $0x38] sm:$0xf]
    %v374 = vld [vmem:[%s5 + $0x3c] sm:$0xf]
    %v375 = vld [vmem:[%s6] sm:$0x1]
    %v377 = vlaneseq
    %v378 = vshrl.u32 %v377, 7
    %v379 = vsub.s32 0, %v378
    %v380 = vrot.slane %v375, %v379
    %v398 = vunpack.c.l.b16 %v359
    %v399 = vunpack.c.l.b16 %v360
    %v400 = vunpack.c.l.b16 %v361
    %v401 = vunpack.c.l.b16 %v362
    %v402 = vunpack.c.l.b16 %v363
    %v403 = vunpack.c.l.b16 %v364
    %v404 = vunpack.c.l.b16 %v365
    %v405 = vunpack.c.l.b16 %v366
    %v406 = vunpack.c.l.b16 %v367
    %v407 = vunpack.c.l.b16 %v368
    %v408 = vunpack.c.l.b16 %v369
    %v409 = vunpack.c.l.b16 %v370
    %v410 = vunpack.c.l.b16 %v371
    %v411 = vunpack.c.l.b16 %v372
    %v412 = vunpack.c.l.b16 %v373
    %v413 = vunpack.c.l.b16 %v374
    %v414 = vpack.c.b16 %v399, %v398
    %v415 = vpack.c.b16 %v401, %v400
    %v416 = vpack.c.b16 %v403, %v402
    %v417 = vpack.c.b16 %v405, %v404
    %v418 = vpack.c.b16 %v407, %v406
    %v419 = vpack.c.b16 %v409, %v408
    %v420 = vpack.c.b16 %v411, %v410
    %v421 = vpack.c.b16 %v413, %v412
    %430 = vmatprep.subr.bf16.mxu0 0
    %431 = vmatpush1.bf16.msra.mxu0 %v414
    %432 = vmatprep.subr.bf16.mxu0 0
    %433 = vmatpush1.bf16.msra.mxu0 %v415
    %434 = vmatprep.subr.bf16.mxu0 0
    %435 = vmatpush1.bf16.msra.mxu0 %v416
    %436 = vmatprep.subr.bf16.mxu0 0
    %437 = vmatpush1.bf16.msra.mxu0 %v417
    %438 = vmatprep.subr.bf16.mxu0 0
    %439 = vmatpush1.bf16.msra.mxu0 %v418
    %440 = vmatprep.subr.bf16.mxu0 0
    %441 = vmatpush1.bf16.msra.mxu0 %v419
    %442 = vmatprep.subr.bf16.mxu0 0
    %443 = vmatpush1.bf16.msra.mxu0 %v420
    %444 = vmatprep.subr.bf16.mxu0 0
    %445 = vmatpush1.bf16.msra.mxu0 %v421
    %446 = vmatprep.subr.bf16.mxu0 0
    %447 = vmatpush1.bf16.msra.mxu0 0
    %448 = vmatprep.subr.bf16.mxu0 0
    %449 = vmatpush1.bf16.msra.mxu0 0
    %450 = vmatprep.subr.bf16.mxu0 0
    %451 = vmatpush1.bf16.msra.mxu0 0
    %452 = vmatprep.subr.bf16.mxu0 0
    %453 = vmatpush1.bf16.msra.mxu0 0
    %454 = vmatprep.subr.bf16.mxu0 0
    %455 = vmatpush1.bf16.msra.mxu0 0
    %456 = vmatprep.subr.bf16.mxu0 0
    %457 = vmatpush1.bf16.msra.mxu0 0
    %458 = vmatprep.subr.bf16.mxu0 0
    %459 = vmatpush1.bf16.msra.mxu0 0
    %460 = vmatprep.subr.bf16.mxu0 0
    %461 = vmatpush1.bf16.msra.mxu0 0
    %462 = vmatprep.mubr.bf16.mxu0 0
    %463 = vmatmul.mubr.bf16.gmra.mrb[0].mxu0 %v358
    %v464 = vpop.f32.mrb[0].mxu0
    %v465 = vadd.f32 %v380, %v464
    %v466 = vpop.f32.mrb[0].mxu0
    %v467 = vpop.f32.mrb[0].mxu0
    %v468 = vadd.f32 %v380, %v467
    %v469 = vpop.f32.mrb[0].mxu0
    %470 = vdwg.mxu0
    %vm471 = vcmp.gt.f32.partialorder %v465, 0.0
    %vm472 = vcmp.gt.f32.partialorder %v468, 0.0
    %v473 = vmul.f32 %v465, 0.01
    %v474 = vmul.f32 %v468, 0.01
    %v475 = vsel %vm471, %v465, %v473
    %v476 = vsel %vm472, %v468, %v474
    %v477 = vpack.c.bf16 %v476, %v475
    %v478 = vld [vmem:[%s7] sm:$0xf]
    %v479 = vld [vmem:[%s7 + $0x4] sm:$0xf]
    %v480 = vld [vmem:[%s7 + $0x8] sm:$0xf]
    %v481 = vld [vmem:[%s7 + $0xc] sm:$0xf]
    %v482 = vld [vmem:[%s7 + $0x10] sm:$0xf]
    %v483 = vld [vmem:[%s7 + $0x14] sm:$0xf]
    %v484 = vld [vmem:[%s7 + $0x18] sm:$0xf]
    %v485 = vld [vmem:[%s7 + $0x1c] sm:$0xf]
    %v486 = vld [vmem:[%s8] sm:$0x1]
    %v488 = vlaneseq
    %v489 = vshrl.u32 %v488, 7
    %v490 = vsub.s32 0, %v489
    %v491 = vrot.slane %v486, %v490
    %v501 = vunpack.c.l.b16 %v478
    %v502 = vunpack.c.l.b16 %v479
    %v503 = vunpack.c.l.b16 %v480
    %v504 = vunpack.c.l.b16 %v481
    %v505 = vunpack.c.l.b16 %v482
    %v506 = vunpack.c.l.b16 %v483
    %v507 = vunpack.c.l.b16 %v484
    %v508 = vunpack.c.l.b16 %v485
    %v509 = vpack.c.b16 %v502, %v501
    %v510 = vpack.c.b16 %v504, %v503
    %v511 = vpack.c.b16 %v506, %v505
    %v512 = vpack.c.b16 %v508, %v507
    %vm517 = vcmask 523264
    %v519 = vsel %vm517, %v477, 0
    %521 = vmatprep.subr.bf16.mxu0 0
    %522 = vmatpush1.bf16.msra.mxu0 %v509
    %523 = vmatprep.subr.bf16.mxu0 0
    %524 = vmatpush1.bf16.msra.mxu0 %v510
    %525 = vmatprep.subr.bf16.mxu0 0
    %526 = vmatpush1.bf16.msra.mxu0 %v511
    %527 = vmatprep.subr.bf16.mxu0 0
    %528 = vmatpush1.bf16.msra.mxu0 %v512
    %529 = vmatprep.subr.bf16.mxu0 0
    %530 = vmatpush1.bf16.msra.mxu0 0
    %531 = vmatprep.subr.bf16.mxu0 0
    %532 = vmatpush1.bf16.msra.mxu0 0
    %533 = vmatprep.subr.bf16.mxu0 0
    %534 = vmatpush1.bf16.msra.mxu0 0
    %535 = vmatprep.subr.bf16.mxu0 0
    %536 = vmatpush1.bf16.msra.mxu0 0
    %537 = vmatprep.subr.bf16.mxu0 0
    %538 = vmatpush1.bf16.msra.mxu0 0
    %539 = vmatprep.subr.bf16.mxu0 0
    %540 = vmatpush1.bf16.msra.mxu0 0
    %541 = vmatprep.subr.bf16.mxu0 0
    %542 = vmatpush1.bf16.msra.mxu0 0
    %543 = vmatprep.subr.bf16.mxu0 0
    %544 = vmatpush1.bf16.msra.mxu0 0
    %545 = vmatprep.subr.bf16.mxu0 0
    %546 = vmatpush1.bf16.msra.mxu0 0
    %547 = vmatprep.subr.bf16.mxu0 0
    %548 = vmatpush1.bf16.msra.mxu0 0
    %549 = vmatprep.subr.bf16.mxu0 0
    %550 = vmatpush1.bf16.msra.mxu0 0
    %551 = vmatprep.subr.bf16.mxu0 0
    %552 = vmatpush1.bf16.msra.mxu0 0
    %553 = vmatprep.mubr.bf16.mxu0 0
    %554 = vmatmul.mubr.bf16.gmra.mrb[0].mxu0 %v519
    %v555 = vpop.f32.mrb[0].mxu0
    %v556 = vadd.f32 %v491, %v555
    %v557 = vpop.f32.mrb[0].mxu0
    %v558 = vpop.f32.mrb[0].mxu0
    %v559 = vadd.f32 %v491, %v558
    %v560 = vpop.f32.mrb[0].mxu0
    %561 = vdwg.mxu0
    %vm562 = vcmp.gt.f32.partialorder %v556, 0.0
    %vm563 = vcmp.gt.f32.partialorder %v559, 0.0
    %v564 = vmul.f32 %v556, 0.01
    %v565 = vmul.f32 %v559, 0.01
    %v566 = vsel %vm562, %v556, %v564
    %v567 = vsel %vm563, %v559, %v565
    %vm568 = vcmask 64512
    %569 = vst.msk [vmem:[%s9] sm:$0xff] %vm568, %v566
    %570 = vst.msk [vmem:[%s9 + $0x8] sm:$0xff] %vm568, %v567
    // Predicated region
    $region42: #{nn_demand_forward.1} parent=1 // pred_check
      _
    $region43: #{nn_demand_forward.1} parent=1 // pred_check_branch
      %572 = sbr.rel (0) target = $region45
    $region44: #{nn_demand_forward.1} parent=1 // pred_region
      _
    $region45: #{nn_demand_forward.1} parent=1 // pred_fallthru
      _
    // Predicated region
    $region46: #{nn_demand_forward.1} parent=1 // pred_check
      _
    $region47: #{nn_demand_forward.1} parent=1 // pred_check_branch
      %574 = sbr.rel (0) target = $region49
    $region48: #{nn_demand_forward.1} parent=1 // pred_region
      _
    $region49: #{nn_demand_forward.1} parent=1 // pred_fallthru
      _
    %575 = vsyncpa [#allocation3], 1

</llo_original>
